<compile_context>
chip_gen: v7x
topology: tpu7x:2x2x1
jax: 0.10.0
libtpu: 0.0.40
codegen_flags: <defaults>
</compile_context>

<pallas_src>
import math
import functools

import jax
import jax.numpy as jnp
from jax import lax
from jax.experimental import pallas as pl
from jax.experimental.pallas import tpu as pltpu


# ----------------------------------------------------------------------------
# Kernel 1: patch embedding (the ViT conv with stride == kernel == patch size
# is exactly a matmul over flattened patches).
# ----------------------------------------------------------------------------
def _patch_embed_kernel(patches_ref, w_ref, b_ref, out_ref):
    out_ref[...] = (
        jnp.dot(patches_ref[...], w_ref[...], preferred_element_type=jnp.float32)
        + b_ref[...]
    )


def patch_embed(patches, w, b):
    """patches: (N, PD) f32, w: (PD, H) bf16, b: (1, H) f32 -> (N, H) f32."""
    n, pd = patches.shape
    h = w.shape[1]

    # Lane-dense contraction: pad PD up to a multiple of 128 (zero padding
    # leaves the matmul unchanged) and feed bf16 operands to the MXU.
    pd_pad = max(128, ((pd + 127) // 128) * 128)
    n_pad = ((n + 7) // 8) * 8
    patches_p = jnp.zeros((n_pad, pd_pad), jnp.bfloat16).at[:n, :pd].set(
        patches.astype(jnp.bfloat16))
    w_p = jnp.zeros((pd_pad, h), jnp.bfloat16).at[:pd, :].set(w)

    row_tile = n_pad
    for cand in (512, 256, 128, 64, 32, 16, 8):
        if n_pad % cand == 0:
            row_tile = cand
            break

    def const(shape):
        # Weights never change across the grid -> single buffer.
        return pl.BlockSpec(shape, lambda i: tuple(0 for _ in shape),
                            pipeline_mode=pl.Buffered(buffer_count=1))

    out = pl.pallas_call(
        _patch_embed_kernel,
        out_shape=jax.ShapeDtypeStruct((n_pad, h), jnp.float32),
        grid=(n_pad // row_tile,),
        in_specs=[
            pl.BlockSpec((row_tile, pd_pad), lambda i: (i, 0)),
            const((pd_pad, h)),
            const((1, h)),
        ],
        out_specs=pl.BlockSpec((row_tile, h), lambda i: (i, 0)),
        compiler_params=pltpu.CompilerParams(dimension_semantics=("parallel",)),
    )(patches_p, w_p, b)
    return out[:n]


# ----------------------------------------------------------------------------
# Kernel 2: the WHOLE pre-LN ViT encoder fused in one pallas_call.
# Grid axis 0 = layer (sequential / "arbitrary").  Hidden state lives in a
# VMEM scratch across layers; each layer's output (== what the forward hook
# captures) is written to the per-layer output slot.
# ----------------------------------------------------------------------------
def _fused_encoder_kernel(
    x_ref, mask_ref,
    ln1_g_ref, ln1_b_ref,
    wqkv_ref, bqkv_ref,
    wo_ref, bo_ref,
    ln2_g_ref, ln2_b_ref,
    w1_ref, b1_ref, w2_ref, b2_ref,
    feat_ref,
    h_scratch, ctx_scratch,
    *, num_heads, batch, s_pad,
):
    layer = pl.program_id(0)

    @pl.when(layer == 0)
    def _():
        h_scratch[...] = x_ref[...]          # load initial hidden state once

    x = h_scratch[...]                       # (B*S_pad, H) f32, VMEM-resident
    _, h = x.shape
    hd = h // num_heads
    scale = 1.0 / math.sqrt(hd)
    mask_bias = mask_ref[...]                # (1, S_pad): 0 real key, -1e30 pad

    def layer_norm(v, g, b):
        # f32 elementwise math (no bf16 VPU on v5e).
        mu = jnp.mean(v, axis=-1, keepdims=True)
        var = jnp.mean((v - mu) ** 2, axis=-1, keepdims=True)
        return (v - mu) * lax.rsqrt(var + 1e-12) * g + b

    # ---- attention block (pre-LN); batch folded into the row dim ----
    h1 = layer_norm(x, ln1_g_ref[0], ln1_b_ref[0]).astype(jnp.bfloat16)
    qkv = (jnp.dot(h1, wqkv_ref[0], preferred_element_type=jnp.float32)
           + bqkv_ref[0])                    # (B*S_pad, 3H) f32
    q = qkv[:, 0:h].astype(jnp.bfloat16)
    k = qkv[:, h:2 * h].astype(jnp.bfloat16)
    v = qkv[:, 2 * h:3 * h].astype(jnp.bfloat16)

    # Per-(batch, head) scores/softmax/ctx.  Each head's ctx lands in its
    # 128-lane slice of ctx_scratch so Wo becomes one full-depth K=H matmul.
    for b in range(batch):
        r0 = b * s_pad
        for hi in range(num_heads):
            c0 = hi * hd
            qh = q[r0:r0 + s_pad, c0:c0 + hd]
            kh = k[r0:r0 + s_pad, c0:c0 + hd]
            vh = v[r0:r0 + s_pad, c0:c0 + hd]
            # Contract on the last dim of both operands (no explicit transpose).
            scores = lax.dot_general(
                qh, kh, (((1,), (1,)), ((), ())),
                preferred_element_type=jnp.float32) * scale + mask_bias
            scores = scores - jnp.max(scores, axis=-1, keepdims=True)
            p = jnp.exp(scores)
            p = p * pl.reciprocal(jnp.sum(p, axis=-1, keepdims=True), approx=True)
            ctx = jnp.dot(p.astype(jnp.bfloat16), vh,
                          preferred_element_type=jnp.float32)
            ctx_scratch[pl.ds(r0, s_pad), pl.ds(c0, hd)] = ctx.astype(jnp.bfloat16)

    attn = (jnp.dot(ctx_scratch[...], wo_ref[0],
                    preferred_element_type=jnp.float32) + bo_ref[0])
    x2 = x + attn                            # residual (f32)

    # ---- MLP block (pre-LN) ----
    h2 = layer_norm(x2, ln2_g_ref[0], ln2_b_ref[0]).astype(jnp.bfloat16)
    mlp = (jnp.dot(h2, w1_ref[0], preferred_element_type=jnp.float32)
           + b1_ref[0])
    # TODO(synk): HF ViT uses exact (erf) GELU; tanh approximation used here
    # for guaranteed Mosaic lowering.
    mlp = jax.nn.gelu(mlp, approximate=True).astype(jnp.bfloat16)
    mlp = (jnp.dot(mlp, w2_ref[0], preferred_element_type=jnp.float32)
           + b2_ref[0])

    new_h = x2 + mlp
    h_scratch[...] = new_h                   # stays in VMEM for the next layer
    feat_ref[0] = new_h                      # == output[0] captured by the hook


def run_encoder(hstate, stacked, num_heads, *, seq_len):
    """hstate: (B, S_pad, H) f32.  Returns (L, B, S_pad, H) f32 — the hidden
    state after every encoder layer, produced by ONE fused pallas_call."""
    bsz, s_pad, h = hstate.shape
    num_layers = stacked["wqkv"].shape[0]
    m = stacked["w1"].shape[2]
    rows = bsz * s_pad

    x2d = hstate.reshape(rows, h)

    # Key-padding mask bias computed once for all layers / batch elements.
    col = jnp.arange(s_pad, dtype=jnp.int32)[None, :]
    mask_bias = jnp.where(col < seq_len, 0.0, -1e30).astype(jnp.float32)

    def const(shape):
        # Same block every layer step -> single buffer (no pointless double-buf).
        return pl.BlockSpec(shape, lambda l: tuple(0 for _ in shape),
                            pipeline_mode=pl.Buffered(buffer_count=1))

    def per_layer(shape):
        # Leading dim indexed by the layer grid axis -> default double buffer,
        # so the next layer's weight DMA overlaps this layer's compute.
        return pl.BlockSpec((1,) + shape[1:],
                            lambda l, nd=len(shape): (l,) + (0,) * (nd - 1))

    kernel = functools.partial(
        _fused_encoder_kernel, num_heads=num_heads, batch=bsz, s_pad=s_pad)

    feats = pl.pallas_call(
        kernel,
        out_shape=jax.ShapeDtypeStruct((num_layers, rows, h), jnp.float32),
        grid=(num_layers,),
        in_specs=[
            const((rows, h)),                                   # initial hidden state
            const((1, s_pad)),                                  # key padding mask bias
            per_layer((num_layers, 1, h)), per_layer((num_layers, 1, h)),          # LN1
            per_layer((num_layers, h, 3 * h)), per_layer((num_layers, 1, 3 * h)),  # Wqkv
            per_layer((num_layers, h, h)), per_layer((num_layers, 1, h)),          # Wo
            per_layer((num_layers, 1, h)), per_layer((num_layers, 1, h)),          # LN2
            per_layer((num_layers, h, m)), per_layer((num_layers, 1, m)),          # W1
            per_layer((num_layers, m, h)), per_layer((num_layers, 1, h)),          # W2
        ],
        out_specs=pl.BlockSpec((1, rows, h), lambda l: (l, 0, 0)),
        scratch_shapes=[
            pltpu.VMEM((rows, h), jnp.float32),     # resident hidden state
            pltpu.VMEM((rows, h), jnp.bfloat16),    # per-head ctx staging for Wo
        ],
        compiler_params=pltpu.CompilerParams(
            dimension_semantics=("arbitrary",),     # layers are sequential
        ),
    )(
        x2d, mask_bias,
        stacked["ln1_g"], stacked["ln1_b"],
        stacked["wqkv"], stacked["bqkv"],
        stacked["wo"], stacked["bo"],
        stacked["ln2_g"], stacked["ln2_b"],
        stacked["w1"], stacked["b1"], stacked["w2"], stacked["b2"],
    )
    return feats.reshape(num_layers, bsz, s_pad, h)


# ----------------------------------------------------------------------------
# Parameter construction (deterministic, synthetic) and the FeatureExtractor
# forward: run patch embed + fused encoder, collect hooked layer outputs.
# Weights are stored in bf16 (MXU-native), stacked with a leading layer dim;
# biases / LN params stay f32.
# ----------------------------------------------------------------------------
def init_params(key, *, channels, patch, hidden, mlp, num_layers, num_patches):
    patch_dim = channels * patch * patch
    keys = iter(jax.random.split(key, 3 + num_layers * 6))
    std = 0.02

    def nrm(k, shape):
        return (std * jax.random.normal(k, shape)).astype(jnp.bfloat16)

    params = {
        "patch_w": nrm(next(keys), (patch_dim, hidden)),
        "patch_b": jnp.zeros((1, hidden), jnp.float32),
        "cls": (std * jax.random.normal(next(keys), (1, 1, hidden))).astype(jnp.float32),
        "pos": (std * jax.random.normal(next(keys), (1, num_patches + 1, hidden))).astype(jnp.float32),
    }

    wqkv, wo, w1, w2 = [], [], [], []
    for _ in range(num_layers):
        wq = nrm(next(keys), (hidden, hidden))
        wk = nrm(next(keys), (hidden, hidden))
        wv = nrm(next(keys), (hidden, hidden))
        wqkv.append(jnp.concatenate([wq, wk, wv], axis=1))   # (H, 3H) bf16
        wo.append(nrm(next(keys), (hidden, hidden)))
        w1.append(nrm(next(keys), (hidden, mlp)))
        w2.append(nrm(next(keys), (mlp, hidden)))

    L = num_layers
    params["layers"] = {
        "ln1_g": jnp.ones((L, 1, hidden), jnp.float32),
        "ln1_b": jnp.zeros((L, 1, hidden), jnp.float32),
        "wqkv": jnp.stack(wqkv),                              # (L, H, 3H) bf16
        "bqkv": jnp.zeros((L, 1, 3 * hidden), jnp.float32),
        "wo": jnp.stack(wo),                                  # (L, H, H) bf16
        "bo": jnp.zeros((L, 1, hidden), jnp.float32),
        "ln2_g": jnp.ones((L, 1, hidden), jnp.float32),
        "ln2_b": jnp.zeros((L, 1, hidden), jnp.float32),
        "w1": jnp.stack(w1),                                  # (L, H, M) bf16
        "b1": jnp.zeros((L, 1, mlp), jnp.float32),
        "w2": jnp.stack(w2),                                  # (L, M, H) bf16
        "b2": jnp.zeros((L, 1, hidden), jnp.float32),
    }
    return params


def extract_patches_nchw(pixel_values, patch):
    # (B, C, H, W) -> (B*P, C*patch*patch), matching a stride=patch conv's
    # receptive fields (PyTorch NCHW convention).
    b, c, h, w = pixel_values.shape
    gh, gw = h // patch, w // patch
    x = pixel_values.reshape(b, c, gh, patch, gw, patch)
    x = jnp.transpose(x, (0, 2, 4, 1, 3, 5))          # (B, gh, gw, C, p, p)
    return x.reshape(b * gh * gw, c * patch * patch), gh * gw


def feature_extractor_forward(params, x, *, layers, patch, num_heads):
    """Mirrors FeatureExtractor.forward: runs the model on the input dict and
    returns {layer_id: hidden_states after that encoder layer}."""
    pixel_values = x["pixel_values"]
    bsz = pixel_values.shape[0]
    hidden = params["patch_w"].shape[1]

    patches, num_patches = extract_patches_nchw(pixel_values, patch)
    tok = patch_embed(patches, params["patch_w"], params["patch_b"])
    tok = tok.reshape(bsz, num_patches, hidden)

    cls = jnp.broadcast_to(params["cls"], (bsz, 1, hidden)).astype(jnp.float32)
    hstate = jnp.concatenate([cls, tok], axis=1) + params["pos"]

    # Pad the sequence once (multiple of 8 sublanes); the kernel masks padded keys.
    s_real = num_patches + 1
    s_pad = ((s_real + 7) // 8) * 8
    if s_pad != s_real:
        hstate = jnp.pad(hstate, ((0, 0), (0, s_pad - s_real), (0, 0)))

    # One fused pallas_call over all encoder layers; hidden state stays
    # VMEM-resident between layers.
    all_feats = run_encoder(hstate, params["layers"], num_heads, seq_len=s_real)

    features = {}
    for layer_id in layers:
        # == output[0] captured by the hook (real tokens only).
        features[layer_id] = all_feats[layer_id, :, :s_real, :]
    return features


if __name__ == "__main__":
    # Small demo config, but lane-dense: hidden / mlp / head_dim multiples of 128.
    B, C, IMG, PATCH = 2, 4, 16, 4
    HIDDEN, MLP, HEADS, NUM_LAYERS = 256, 512, 2, 2
    LAYERS = [0, 1]
    NUM_PATCHES = (IMG // PATCH) ** 2  # 16 -> seq = 17 with CLS (padded to 24)

    key = jax.random.PRNGKey(0)
    k_param, k_x = jax.random.split(key)
    params = init_params(
        k_param, channels=C, patch=PATCH, hidden=HIDDEN, mlp=MLP,
        num_layers=NUM_LAYERS, num_patches=NUM_PATCHES,
    )
    pixel_values = jax.random.normal(k_x, (B, C, IMG, IMG), dtype=jnp.float32)

    feats = feature_extractor_forward(
        params, {"pixel_values": pixel_values},
        layers=LAYERS, patch=PATCH, num_heads=HEADS,
    )
    for lid in LAYERS:
        jax.block_until_ready(feats[lid])
        assert feats[lid].shape == (B, NUM_PATCHES + 1, HIDDEN)
        assert bool(jnp.isfinite(feats[lid]).all())
    print("KERNEL_OK")
</pallas_src>

<mosaic_0001>
module attributes {stable_mosaic.version = 11 : i64} {
  func.func @_patch_embed_kernel(%arg0: i32, %arg1: memref<32x128xbf16, #tpu.memory_space<vmem>>, %arg2: memref<128x256xbf16, #tpu.memory_space<vmem>>, %arg3: memref<1x256xf32, #tpu.memory_space<vmem>>, %arg4: memref<32x256xf32, #tpu.memory_space<vmem>>) attributes {dimension_semantics = [#tpu.dimension_semantics<parallel>], iteration_bounds = array<i64: 1>, scalar_prefetch = 0 : i64, scratch_operands = 0 : i64, tpu.core_type = #tpu.core_type<tc>, window_params = [{transform_indices = @transform_0, window_bounds = array<i64: 32, 128>}, {pipeline_mode = #tpu.pipeline_mode<synchronous>, transform_indices = @transform_1, window_bounds = array<i64: 128, 256>}, {pipeline_mode = #tpu.pipeline_mode<synchronous>, transform_indices = @transform_2, window_bounds = array<i64: 1, 256>}, {transform_indices = @transform_3, window_bounds = array<i64: 32, 256>}]} {
    %c0 = arith.constant 0 : index
    %c0_0 = arith.constant 0 : index
    %0 = vector.load %arg1[%c0, %c0_0] : memref<32x128xbf16, #tpu.memory_space<vmem>>, vector<32x128xbf16>
    %c0_1 = arith.constant 0 : index
    %c0_2 = arith.constant 0 : index
    %1 = vector.load %arg2[%c0_1, %c0_2] : memref<128x256xbf16, #tpu.memory_space<vmem>>, vector<128x256xbf16>
    %cst = arith.constant dense<0.000000e+00> : vector<32x256xf32>
    %2 = tpu.matmul %0, %1, %cst {dimension_numbers = #tpu.dot_dimension_numbers<[1], [0], [0], [1], [0, 0, 1, 1], [], []>} : vector<32x128xbf16>, vector<128x256xbf16>, vector<32x256xf32> -> vector<32x256xf32>
    %c0_3 = arith.constant 0 : index
    %c0_4 = arith.constant 0 : index
    %3 = vector.load %arg3[%c0_3, %c0_4] : memref<1x256xf32, #tpu.memory_space<vmem>>, vector<1x256xf32>
    %4 = vector.broadcast %3 : vector<1x256xf32> to vector<32x256xf32>
    %5 = arith.addf %2, %4 : vector<32x256xf32>
    %c0_5 = arith.constant 0 : index
    %c0_6 = arith.constant 0 : index
    %6 = vector.load %arg4[%c0_5, %c0_6] : memref<32x256xf32, #tpu.memory_space<vmem>>, vector<32x256xf32>
    tpu.vector_store %arg4[%c0_5, %c0_6], %5 {strides = array<i32>} : memref<32x256xf32, #tpu.memory_space<vmem>>, vector<32x256xf32>,
    return
  }
  func.func @transform_0(%arg0: i32) -> (i32, i32) {
    %c0_i32 = arith.constant 0 : i32
    %c0_i32_0 = arith.constant 0 : i32
    return %arg0, %c0_i32 : i32, i32
  }
  func.func @transform_1(%arg0: i32) -> (i32, i32) {
    %c0_i32 = arith.constant 0 : i32
    %c0_i32_0 = arith.constant 0 : i32
    %c0_i32_1 = arith.constant 0 : i32
    return %c0_i32, %c0_i32_0 : i32, i32
  }
  func.func @transform_2(%arg0: i32) -> (i32, i32) {
    %c0_i32 = arith.constant 0 : i32
    %c0_i32_0 = arith.constant 0 : i32
    %c0_i32_1 = arith.constant 0 : i32
    return %c0_i32, %c0_i32_0 : i32, i32
  }
  func.func @transform_3(%arg0: i32) -> (i32, i32) {
    %c0_i32 = arith.constant 0 : i32
    %c0_i32_0 = arith.constant 0 : i32
    return %arg0, %c0_i32 : i32, i32
  }
}

</mosaic_0001>

<llo_original>
// kernel: tpu_custom_call.1
$region0: #{tpu_custom_call.1}
  #allocation0 [shape = 'u32[]', space=smem, size = 0x4, offset = 0x4, fixed_abs, tag = 'smem constant byte address 0x4 - core index']
  #allocation1 [shape = 'u32[144,128]{1,0:T(1,128)}', space=vmem, size = 0x12000, scoped, tag = 'internal scratch']
  %s0 = inlined_call_operand.hbm [shape: bf16[32,128], index: 0, kind: input, shape index: {}]
  %s1 = inlined_call_operand.hbm [shape: bf16[128,256], index: 1, kind: input, shape index: {}]
  %s2 = inlined_call_operand.vmem [shape: f32[1,256], index: 2, kind: input, shape index: {}]
  %s3 = inlined_call_operand.hbm [shape: f32[32,256], index: 3, kind: output, shape index: {}]
  %s4 = sld [smem:[#allocation0]]
  $region30: #{tpu_custom_call.1} parent=0
    _
  %s6 = ssub.s32 1, %s4
  %s7 = scalar_select 0, %s6, %s4
  $region1: #{tpu_custom_call.1} parent=0
    #allocation2 [shape = 'u8[8192]{0}', space=vmem, size = 0x2000, scoped, tag = 'input window, operand 0, single buffered']
    #allocation3 [shape = 's32[1]{0}', space=sflag, size = 0x4, scoped, tag = 'scoped memory for tpu_custom_call.1']
    #allocation4 [shape = 's32[1]{0}', space=sflag, size = 0x4, scoped, tag = 'scoped memory for tpu_custom_call.1']
    #allocation5 [shape = 'u8[65536]{0}', space=vmem, size = 0x10000, scoped, tag = 'input window, operand 1, single buffered']
    #allocation6 [shape = 's32[1]{0}', space=sflag, size = 0x4, scoped, tag = 'scoped memory for tpu_custom_call.1']
    #allocation7 [shape = 'u8[32768]{0}', space=vmem, size = 0x8000, scoped, tag = 'output window, operand 0, single buffered']
    %8 = vsyncpa [#allocation3], 0
    %9 = vsyncpa [#allocation6], 0
    %10 = vsyncpa [#allocation4], 0
    // Predicated region
    $region2: #{tpu_custom_call.1} parent=1 // pred_check
      _
    $region3: #{tpu_custom_call.1} parent=1 // pred_check_branch
      %12 = sbr.rel (0) target = $region5
    $region4: #{tpu_custom_call.1} parent=1 // pred_region
      %s14 = ssub.s32 256, 256
      %15 = vsyncadd [#allocation3], %s14
      %s16 = sshll.u32 [#allocation2], 4
      %s17 = int_to_ptr.vmem [resolvable:$true] %s16
      %22 = dma.hbm_to_vmem [thread:$0]  %s0, 256, %s17, [#allocation3], 64, 64, 4
    $region5: #{tpu_custom_call.1} parent=1 // pred_fallthru
      _
    // Predicated region
    $region6: #{tpu_custom_call.1} parent=1 // pred_check
      _
    $region7: #{tpu_custom_call.1} parent=1 // pred_check_branch
      %24 = sbr.rel (0) target = $region9
    $region8: #{tpu_custom_call.1} parent=1 // pred_region
      %s26 = ssub.s32 2048, 2048
      %27 = vsyncadd [#allocation6], %s26
      %s28 = sshll.u32 [#allocation5], 4
      %s29 = int_to_ptr.vmem [resolvable:$true] %s28
      %34 = dma.hbm_to_vmem [thread:$0]  %s1, 2048, %s29, [#allocation6], 128, 128, 8
    $region9: #{tpu_custom_call.1} parent=1 // pred_fallthru
      _
    // Predicated region
    $region10: #{tpu_custom_call.1} parent=1 // pred_check
      _
    $region11: #{tpu_custom_call.1} parent=1 // pred_check_branch
      %36 = sbr.rel (0) target = $region13
    $region12: #{tpu_custom_call.1} parent=1 // pred_region
      _
    $region13: #{tpu_custom_call.1} parent=1 // pred_fallthru
      _
    // Predicated region
    $region14: #{tpu_custom_call.1} parent=1 // pred_check
      _
    $region15: #{tpu_custom_call.1} parent=1 // pred_check_branch
      %38 = sbr.rel (0) target = $region17
    $region16: #{tpu_custom_call.1} parent=1 // pred_region
      %39 = dma.done [#allocation3], 256
    $region17: #{tpu_custom_call.1} parent=1 // pred_fallthru
      _
    // Predicated region
    $region18: #{tpu_custom_call.1} parent=1 // pred_check
      _
    $region19: #{tpu_custom_call.1} parent=1 // pred_check_branch
      %41 = sbr.rel (0) target = $region21
    $region20: #{tpu_custom_call.1} parent=1 // pred_region
      %42 = dma.done [#allocation6], 2048
    $region21: #{tpu_custom_call.1} parent=1 // pred_fallthru
      _
    %v44 = vld [vmem:[#allocation2] sm:$0xf]
    %v45 = vld [vmem:[#allocation2 + $0x4] sm:$0xf]
    %v46 = vld [vmem:[#allocation2 + $0x8] sm:$0xf]
    %v47 = vld [vmem:[#allocation2 + $0xc] sm:$0xf]
    %v48 = vld [vmem:[#allocation5] sm:$0xff]
    %v49 = vld [vmem:[#allocation5 + $0x8] sm:$0xff]
    %v50 = vld [vmem:[#allocation5 + $0x10] sm:$0xff]
    %v51 = vld [vmem:[#allocation5 + $0x18] sm:$0xff]
    %v52 = vld [vmem:[#allocation5 + $0x20] sm:$0xff]
    %v53 = vld [vmem:[#allocation5 + $0x28] sm:$0xff]
    %v54 = vld [vmem:[#allocation5 + $0x30] sm:$0xff]
    %v55 = vld [vmem:[#allocation5 + $0x38] sm:$0xff]
    %v56 = vld [vmem:[#allocation5 + $0x40] sm:$0xff]
    %v57 = vld [vmem:[#allocation5 + $0x48] sm:$0xff]
    %v58 = vld [vmem:[#allocation5 + $0x50] sm:$0xff]
    %v59 = vld [vmem:[#allocation5 + $0x58] sm:$0xff]
    %v60 = vld [vmem:[#allocation5 + $0x60] sm:$0xff]
    %v61 = vld [vmem:[#allocation5 + $0x68] sm:$0xff]
    %v62 = vld [vmem:[#allocation5 + $0x70] sm:$0xff]
    %v63 = vld [vmem:[#allocation5 + $0x78] sm:$0xff]
    %v64 = vld [vmem:[%s2] sm:$0x3]
    %v66 = vlaneseq
    %v67 = vshrl.u32 %v66, 7
    %v68 = vsub.s32 0, %v67
    %v69 = vrot.slane %v64, %v68
    %v70 = vlaneseq
    %v71 = vshrl.u32 %v70, 7
    %v72 = vsub.s32 1, %v71
    %v73 = vrot.slane %v64, %v72
    %v80 = vunpack.c.l.b16 %v44
    %v81 = vunpack.c.l.b16 %v45
    %v82 = vunpack.c.l.b16 %v46
    %v83 = vunpack.c.l.b16 %v47
    %v84 = vpack.c.b16 %v81, %v80
    %v85 = vpack.c.b16 %v83, %v82
    %v104 = vunpack.c.l.b16 %v48
    %v105 = vunpack.c.h.b16 %v48
    %v106 = vunpack.c.l.b16 %v49
    %v107 = vunpack.c.h.b16 %v49
    %v108 = vunpack.c.l.b16 %v50
    %v109 = vunpack.c.h.b16 %v50
    %v110 = vunpack.c.l.b16 %v51
    %v111 = vunpack.c.h.b16 %v51
    %v112 = vunpack.c.l.b16 %v52
    %v113 = vunpack.c.h.b16 %v52
    %v114 = vunpack.c.l.b16 %v53
    %v115 = vunpack.c.h.b16 %v53
    %v116 = vunpack.c.l.b16 %v54
    %v117 = vunpack.c.h.b16 %v54
    %v118 = vunpack.c.l.b16 %v55
    %v119 = vunpack.c.h.b16 %v55
    %v120 = vunpack.c.l.b16 %v56
    %v121 = vunpack.c.h.b16 %v56
    %v122 = vunpack.c.l.b16 %v57
    %v123 = vunpack.c.h.b16 %v57
    %v124 = vunpack.c.l.b16 %v58
    %v125 = vunpack.c.h.b16 %v58
    %v126 = vunpack.c.l.b16 %v59
    %v127 = vunpack.c.h.b16 %v59
    %v128 = vunpack.c.l.b16 %v60
    %v129 = vunpack.c.h.b16 %v60
    %v130 = vunpack.c.l.b16 %v61
    %v131 = vunpack.c.h.b16 %v61
    %v132 = vunpack.c.l.b16 %v62
    %v133 = vunpack.c.h.b16 %v62
    %v134 = vunpack.c.l.b16 %v63
    %v135 = vunpack.c.h.b16 %v63
    %v136 = vpack.c.b16 %v106, %v104
    %v137 = vpack.c.b16 %v107, %v105
    %v138 = vpack.c.b16 %v110, %v108
    %v139 = vpack.c.b16 %v111, %v109
    %v140 = vpack.c.b16 %v114, %v112
    %v141 = vpack.c.b16 %v115, %v113
    %v142 = vpack.c.b16 %v118, %v116
    %v143 = vpack.c.b16 %v119, %v117
    %v144 = vpack.c.b16 %v122, %v120
    %v145 = vpack.c.b16 %v123, %v121
    %v146 = vpack.c.b16 %v126, %v124
    %v147 = vpack.c.b16 %v127, %v125
    %v148 = vpack.c.b16 %v130, %v128
    %v149 = vpack.c.b16 %v131, %v129
    %v150 = vpack.c.b16 %v134, %v132
    %v151 = vpack.c.b16 %v135, %v133
    %168 = vmatprep.subr.bf16.mxu0 %v137
    %169 = vmatpush1.bf16.msra.mxu0 %v136
    %170 = vmatprep.subr.bf16.mxu0 %v139
    %171 = vmatpush1.bf16.msra.mxu0 %v138
    %172 = vmatprep.subr.bf16.mxu0 %v141
    %173 = vmatpush1.bf16.msra.mxu0 %v140
    %174 = vmatprep.subr.bf16.mxu0 %v143
    %175 = vmatpush1.bf16.msra.mxu0 %v142
    %176 = vmatprep.subr.bf16.mxu0 %v145
    %177 = vmatpush1.bf16.msra.mxu0 %v144
    %178 = vmatprep.subr.bf16.mxu0 %v147
    %179 = vmatpush1.bf16.msra.mxu0 %v146
    %180 = vmatprep.subr.bf16.mxu0 %v149
    %181 = vmatpush1.bf16.msra.mxu0 %v148
    %182 = vmatprep.subr.bf16.mxu0 %v151
    %183 = vmatpush1.bf16.msra.mxu0 %v150
    %184 = vmatprep.subr.bf16.mxu0 0
    %185 = vmatpush1.bf16.msra.mxu0 0
    %186 = vmatprep.subr.bf16.mxu0 0
    %187 = vmatpush1.bf16.msra.mxu0 0
    %188 = vmatprep.subr.bf16.mxu0 0
    %189 = vmatpush1.bf16.msra.mxu0 0
    %190 = vmatprep.subr.bf16.mxu0 0
    %191 = vmatpush1.bf16.msra.mxu0 0
    %192 = vmatprep.subr.bf16.mxu0 0
    %193 = vmatpush1.bf16.msra.mxu0 0
    %194 = vmatprep.subr.bf16.mxu0 0
    %195 = vmatpush1.bf16.msra.mxu0 0
    %196 = vmatprep.subr.bf16.mxu0 0
    %197 = vmatpush1.bf16.msra.mxu0 0
    %198 = vmatprep.subr.bf16.mxu0 0
    %199 = vmatpush1.bf16.msra.mxu0 0
    %200 = vmatprep.mubr.bf16.mxu0 0
    %201 = vmatmul.mubr.bf16.gmra.mrb[0].mxu0 %v84
    %v202 = vpop.f32.mrb[0].mxu0
    %v203 = vadd.f32 %v69, %v202
    %v204 = vpop.f32.mrb[0].mxu0
    %v205 = vadd.f32 %v73, %v204
    %v206 = vpop.f32.mrb[0].mxu0
    %v207 = vadd.f32 %v69, %v206
    %v208 = vpop.f32.mrb[0].mxu0
    %v209 = vadd.f32 %v73, %v208
    %210 = vmatprep.mubr.bf16.mxu0 0
    %211 = vmatmul.mubr.bf16.gmra.mrb[0].mxu0 %v85
    %v212 = vpop.f32.mrb[0].mxu0
    %v213 = vadd.f32 %v69, %v212
    %v214 = vpop.f32.mrb[0].mxu0
    %v215 = vadd.f32 %v73, %v214
    %v216 = vpop.f32.mrb[0].mxu0
    %v217 = vadd.f32 %v69, %v216
    %v218 = vpop.f32.mrb[0].mxu0
    %v219 = vadd.f32 %v73, %v218
    %220 = vdwg.mxu0
    %221 = vst [vmem:[#allocation7] sm:$0xff] %v203
    %222 = vst [vmem:[#allocation7 + $0x8] sm:$0xff] %v205
    %223 = vst [vmem:[#allocation7 + $0x10] sm:$0xff] %v207
    %224 = vst [vmem:[#allocation7 + $0x18] sm:$0xff] %v209
    %225 = vst [vmem:[#allocation7 + $0x20] sm:$0xff] %v213
    %226 = vst [vmem:[#allocation7 + $0x28] sm:$0xff] %v215
    %227 = vst [vmem:[#allocation7 + $0x30] sm:$0xff] %v217
    %228 = vst [vmem:[#allocation7 + $0x38] sm:$0xff] %v219
    // Predicated region
    $region22: #{tpu_custom_call.1} parent=1 // pred_check
      _
    $region23: #{tpu_custom_call.1} parent=1 // pred_check_branch
      %230 = sbr.rel (0) target = $region25
    $region24: #{tpu_custom_call.1} parent=1 // pred_region
      %s232 = ssub.s32 1024, 1024
      %233 = vsyncadd [#allocation4], %s232
      %s234 = sshll.u32 [#allocation7], 4
      %s235 = int_to_ptr.vmem [resolvable:$true] %s234
      %240 = dma.vmem_to_hbm [thread:$0]  %s235, 1024, %s3, [#allocation4], 256, 256, 16
    $region25: #{tpu_custom_call.1} parent=1 // pred_fallthru
      _
    // Predicated region
    $region26: #{tpu_custom_call.1} parent=1 // pred_check
      _
    $region27: #{tpu_custom_call.1} parent=1 // pred_check_branch
      %242 = sbr.rel (0) target = $region29
    $region28: #{tpu_custom_call.1} parent=1 // pred_region
      %243 = dma.done [#allocation4], 1024
    $region29: #{tpu_custom_call.1} parent=1 // pred_fallthru
      _
    %244 = vsyncpa [#allocation3], 1
    %245 = vsyncpa [#allocation6], 1
    %246 = vsyncpa [#allocation4], 1

</llo_original>
